<compile_context>
chip_gen: v7x
topology: tpu7x:2x2x1
jax: 0.10.0
libtpu: 0.0.40
codegen_flags: <defaults>
</compile_context>

<pallas_src>
import functools

import jax
import jax.numpy as jnp
from jax.experimental import pallas as pl
from jax.experimental.pallas import tpu as pltpu


OUT_LANES = 128  # lane-dense output slab width


def _round_up(v, m):
    return (v + m - 1) // m * m


def _init_value_kernel(x_ref, w1_ref, b1_ref, w2_ref, b2_ref,
                       w3_ref, b3_ref, w4_ref, b4_ref, out_ref,
                       gmax_ref, *, TB, TN, F, N, mask_rows):
    """One grid step = (batch block bb, object tile nb).

    x_ref   : (TB, TN, F) bf16     object rows for TB batches x TN objects
    w*_ref  : resident weights/biases (constant block index across the grid)
    out_ref : (1, TB, OUT_LANES)   lane-dense f32 output slab for this batch block
    gmax_ref: (TB, H)              running per-batch max accumulator (VMEM scratch)
    """
    nb = pl.program_id(1)

    # ---- init running max at the first object tile of this batch block ----
    @pl.when(nb == 0)
    def _():
        gmax_ref[...] = jnp.full(gmax_ref.shape, -jnp.inf, gmax_ref.dtype)

    # ---- per-object MLP on (TB*TN, F) rows: bf16 operands, f32 accumulation (MXU) ----
    xr = x_ref[...].reshape(TB * TN, F)          # collapse leading dims (TN % 16 == 0)
    h = jnp.dot(xr, w1_ref[...], preferred_element_type=jnp.float32)
    h = jnp.maximum(h + b1_ref[...], 0.0)
    h = jnp.dot(h.astype(w2_ref.dtype), w2_ref[...],
                preferred_element_type=jnp.float32)
    h = jnp.maximum(h + b2_ref[...], 0.0)        # (TB*TN, H) f32
    h = h.reshape(TB, TN, h.shape[-1])           # sublane-aligned split

    # ---- mask ALL padded object rows so they can never win the max ----
    if mask_rows:
        obj = nb * TN + jax.lax.broadcasted_iota(jnp.int32, (1, TN, 1), 1)
        h = jnp.where(obj < N, h, -jnp.inf)

    # ---- running per-batch max over object tiles ----
    gmax_ref[...] = jnp.maximum(gmax_ref[...], jnp.max(h, axis=1))

    # ---- finalize on the last object tile: head MLP + logsigmoid for TB batches ----
    @pl.when(nb == pl.num_programs(1) - 1)
    def _():
        g = gmax_ref[...]                                     # (TB, H) f32
        g = jnp.dot(g.astype(w3_ref.dtype), w3_ref[...],
                    preferred_element_type=jnp.float32)
        g = jnp.maximum(g + b3_ref[...], 0.0)
        # H -> 1 head as a VPU multiply + lane reduce (avoids a 1-wide MXU matmul)
        z = jnp.sum(g * w4_ref[...], axis=-1, keepdims=True) + b4_ref[...]   # (TB, 1)
        # numerically stable logsigmoid (log/exp only)
        logsig = jnp.minimum(z, 0.0) - jnp.log(1.0 + jnp.exp(-jnp.abs(z)))
        out_ref[...] = jnp.broadcast_to(logsig[None], out_ref.shape).astype(out_ref.dtype)


def crafting_world_init_value_forward(x, params):
    """x: (B, N, F) float32. Returns (B,) float32 == net[act](x).squeeze(-1)."""
    B, N, F = x.shape
    H = params["w1"].shape[1]

    # ---- tile sizing: fill the MXU / amortize grid-step overhead (VMEM is not binding) ----
    MAX_TN = 512          # cap on object rows per tile
    TARGET_ROWS = 2048    # target MXU rows (TB * TN) per grid step

    N_al = _round_up(N, 16)                      # sublane-align (bf16 packs 16 rows/vreg)
    if N_al <= MAX_TN:
        TN, NB = N_al, 1
    else:
        TN = MAX_TN
        NB = -(-N_al // TN)
    N_tot = NB * TN

    TB = max(8, (TARGET_ROWS // (TN * 8)) * 8)   # batches per step, multiple of 8
    TB = min(TB, 64, _round_up(B, 8))            # don't over-pad tiny batches
    B_pad = _round_up(B, TB)
    NBB = B_pad // TB

    # ---- wrapper layout plumbing: pad objects/batches, cast matmul operands to bf16.
    #      NO feature-dim padding, NO flattening copy of x. ----
    xp = jnp.pad(x, ((0, B_pad - B), (0, N_tot - N), (0, 0))).astype(jnp.bfloat16)
    w1 = params["w1"].astype(jnp.bfloat16)       # (F, H)
    w2 = params["w2"].astype(jnp.bfloat16)       # (H, H)
    w3 = params["w3"].astype(jnp.bfloat16)       # (H, H)
    w4_row = params["w4"].T.astype(jnp.float32)  # (1, H) for the VPU reduce

    kernel = functools.partial(_init_value_kernel, TB=TB, TN=TN, F=F, N=N,
                               mask_rows=(N_tot != N))

    def resident(shape):
        # constant block index -> fetched once, stays resident in VMEM
        return pl.BlockSpec(shape, lambda bb, nb: (0,) * len(shape))

    grid_spec = pltpu.PrefetchScalarGridSpec(
        num_scalar_prefetch=0,
        grid=(NBB, NB),                          # (batch blocks, object tiles)
        in_specs=[
            pl.BlockSpec((TB, TN, F), lambda bb, nb: (bb, nb, 0)),   # x tiles
            resident((F, H)), resident((1, H)),  # w1, b1
            resident((H, H)), resident((1, H)),  # w2, b2
            resident((H, H)), resident((1, H)),  # w3, b3
            resident((1, H)), resident((1, 1)),  # w4 (row), b4
        ],
        out_specs=pl.BlockSpec((1, TB, OUT_LANES), lambda bb, nb: (bb, 0, 0)),
        scratch_shapes=[pltpu.VMEM((TB, H), jnp.float32)],
    )

    out = pl.pallas_call(
        kernel,
        out_shape=jax.ShapeDtypeStruct((NBB, TB, OUT_LANES), jnp.float32),
        grid_spec=grid_spec,
        compiler_params=pltpu.CompilerParams(
            # batch-block axis is independent -> shard across TensorCores (v7x);
            # object-tile axis carries the running max -> arbitrary (reduction last).
            dimension_semantics=("parallel", "arbitrary"),
        ),
    )(xp, w1, params["b1"], w2, params["b2"], w3, params["b3"], w4_row, params["b4"])

    # padded batch slots are finite garbage; slice them away, take lane 0.
    return out.reshape(B_pad, OUT_LANES)[:B, 0]


def make_params(key, F, H):
    """Deterministic synthetic weights. Linear weights stored as (in, out) for jnp.dot."""
    ks = jax.random.split(key, 8)

    def lin(kw, kb, fan_in, fan_out):
        scale = 1.0 / jnp.sqrt(jnp.float32(fan_in))
        w = jax.random.normal(kw, (fan_in, fan_out), jnp.float32) * scale
        b = jax.random.normal(kb, (1, fan_out), jnp.float32) * 0.01
        return w, b

    w1, b1 = lin(ks[0], ks[1], F, H)
    w2, b2 = lin(ks[2], ks[3], H, H)
    w3, b3 = lin(ks[4], ks[5], H, H)
    w4, b4 = lin(ks[6], ks[7], H, 1)
    return dict(w1=w1, b1=b1, w2=w2, b2=b2, w3=w3, b3=b3, w4=w4, b4=b4)


def reference_forward(x, p):
    """Pure-JAX f32 reference of the same forward pass (for correctness checking)."""
    B, N, F = x.shape
    h = jnp.maximum(x.reshape(B * N, F) @ p["w1"] + p["b1"], 0.0)
    h = jnp.maximum(h @ p["w2"] + p["b2"], 0.0)
    g = jnp.max(h.reshape(B, N, -1), axis=1)
    g = jnp.maximum(g @ p["w3"] + p["b3"], 0.0)
    z = g @ p["w4"] + p["b4"]
    return jax.nn.log_sigmoid(z)[:, 0]


if __name__ == "__main__":
    B, N, F, H = 2, 8, 32, 128  # batch, num_objects, object-feature dim, h_dim

    key = jax.random.PRNGKey(0)
    kx, kp = jax.random.split(key)
    x = jax.random.normal(kx, (B, N, F), jnp.float32)
    params = make_params(kp, F, H)

    out = crafting_world_init_value_forward(x, params)
    out = jax.block_until_ready(out)

    ref = reference_forward(x, params)
    assert out.shape == (B,)
    # bf16 matmul operands with f32 accumulation -> loosened tolerance (~1e-2 worst case)
    assert jnp.allclose(out, ref, atol=5e-2, rtol=5e-2), (out, ref)

    print("KERNEL_OK")
</pallas_src>

<mosaic_0001>
module attributes {stable_mosaic.version = 11 : i64} {
  func.func @_init_value_kernel(%arg0: i32, %arg1: i32, %arg2: memref<8x16x32xbf16, #tpu.memory_space<vmem>>, %arg3: memref<32x128xbf16, #tpu.memory_space<vmem>>, %arg4: memref<1x128xf32, #tpu.memory_space<vmem>>, %arg5: memref<128x128xbf16, #tpu.memory_space<vmem>>, %arg6: memref<1x128xf32, #tpu.memory_space<vmem>>, %arg7: memref<128x128xbf16, #tpu.memory_space<vmem>>, %arg8: memref<1x128xf32, #tpu.memory_space<vmem>>, %arg9: memref<1x128xf32, #tpu.memory_space<vmem>>, %arg10: memref<1x1xf32, #tpu.memory_space<vmem>>, %arg11: memref<1x8x128xf32, #tpu.memory_space<vmem>>, %arg12: memref<8x128xf32, #tpu.memory_space<vmem>>) attributes {dimension_semantics = [#tpu.dimension_semantics<parallel>, #tpu.dimension_semantics<arbitrary>], iteration_bounds = array<i64: 1, 1>, scalar_prefetch = 0 : i64, scratch_operands = 1 : i64, tpu.core_type = #tpu.core_type<tc>, window_params = [{transform_indices = @transform_0, window_bounds = array<i64: 8, 16, 32>}, {pipeline_mode = #tpu.pipeline_mode<synchronous>, transform_indices = @transform_1, window_bounds = array<i64: 32, 128>}, {pipeline_mode = #tpu.pipeline_mode<synchronous>, transform_indices = @transform_2, window_bounds = array<i64: 1, 128>}, {pipeline_mode = #tpu.pipeline_mode<synchronous>, transform_indices = @transform_3, window_bounds = array<i64: 128, 128>}, {pipeline_mode = #tpu.pipeline_mode<synchronous>, transform_indices = @transform_4, window_bounds = array<i64: 1, 128>}, {pipeline_mode = #tpu.pipeline_mode<synchronous>, transform_indices = @transform_5, window_bounds = array<i64: 128, 128>}, {pipeline_mode = #tpu.pipeline_mode<synchronous>, transform_indices = @transform_6, window_bounds = array<i64: 1, 128>}, {pipeline_mode = #tpu.pipeline_mode<synchronous>, transform_indices = @transform_7, window_bounds = array<i64: 1, 128>}, {pipeline_mode = #tpu.pipeline_mode<synchronous>, transform_indices = @transform_8, window_bounds = array<i64: 1, 1>}, {transform_indices = @transform_9, window_bounds = array<i64: 1, 8, 128>}]} {
    %c0_i32 = arith.constant 0 : i32
    %0 = arith.cmpi eq, %arg1, %c0_i32 : i32
    %1 = arith.extui %0 : i1 to i32
    %c0_i32_0 = arith.constant 0 : i32
    %2 = arith.cmpi ne, %1, %c0_i32_0 : i32
    scf.if %2 {
      %cst_22 = arith.constant 0xFF800000 : f32
      %38 = vector.broadcast %cst_22 : f32 to vector<8x128xf32>
      %c0_23 = arith.constant 0 : index
      %c0_24 = arith.constant 0 : index
      %39 = vector.load %arg12[%c0_23, %c0_24] : memref<8x128xf32, #tpu.memory_space<vmem>>, vector<8x128xf32>
      tpu.vector_store %arg12[%c0_23, %c0_24], %38 {strides = array<i32>} : memref<8x128xf32, #tpu.memory_space<vmem>>, vector<8x128xf32>,
    } else {
    }
    %c0 = arith.constant 0 : index
    %c0_1 = arith.constant 0 : index
    %c0_2 = arith.constant 0 : index
    %3 = vector.load %arg2[%c0, %c0_1, %c0_2] : memref<8x16x32xbf16, #tpu.memory_space<vmem>>, vector<8x16x32xbf16>
    %4 = vector.shape_cast %3 : vector<8x16x32xbf16> to vector<128x32xbf16>
    %c0_3 = arith.constant 0 : index
    %c0_4 = arith.constant 0 : index
    %5 = vector.load %arg3[%c0_3, %c0_4] : memref<32x128xbf16, #tpu.memory_space<vmem>>, vector<32x128xbf16>
    %cst = arith.constant dense<0.000000e+00> : vector<128x128xf32>
    %6 = tpu.matmul %4, %5, %cst {dimension_numbers = #tpu.dot_dimension_numbers<[1], [0], [0], [1], [0, 0, 1, 1], [], []>} : vector<128x32xbf16>, vector<32x128xbf16>, vector<128x128xf32> -> vector<128x128xf32>
    %c0_5 = arith.constant 0 : index
    %c0_6 = arith.constant 0 : index
    %7 = vector.load %arg4[%c0_5, %c0_6] : memref<1x128xf32, #tpu.memory_space<vmem>>, vector<1x128xf32>
    %8 = vector.broadcast %7 : vector<1x128xf32> to vector<128x128xf32>
    %9 = arith.addf %6, %8 : vector<128x128xf32>
    %cst_7 = arith.constant 0.000000e+00 : f32
    %10 = vector.broadcast %cst_7 : f32 to vector<128x128xf32>
    %11 = arith.maximumf %9, %10 : vector<128x128xf32>
    %12 = arith.truncf %11 : vector<128x128xf32> to vector<128x128xbf16>
    %c0_8 = arith.constant 0 : index
    %c0_9 = arith.constant 0 : index
    %13 = vector.load %arg5[%c0_8, %c0_9] : memref<128x128xbf16, #tpu.memory_space<vmem>>, vector<128x128xbf16>
    %cst_10 = arith.constant dense<0.000000e+00> : vector<128x128xf32>
    %14 = tpu.matmul %12, %13, %cst_10 {dimension_numbers = #tpu.dot_dimension_numbers<[1], [0], [0], [1], [0, 0, 1, 1], [], []>} : vector<128x128xbf16>, vector<128x128xbf16>, vector<128x128xf32> -> vector<128x128xf32>
    %c0_11 = arith.constant 0 : index
    %c0_12 = arith.constant 0 : index
    %15 = vector.load %arg6[%c0_11, %c0_12] : memref<1x128xf32, #tpu.memory_space<vmem>>, vector<1x128xf32>
    %16 = vector.broadcast %15 : vector<1x128xf32> to vector<128x128xf32>
    %17 = arith.addf %14, %16 : vector<128x128xf32>
    %cst_13 = arith.constant 0.000000e+00 : f32
    %18 = vector.broadcast %cst_13 : f32 to vector<128x128xf32>
    %19 = arith.maximumf %17, %18 : vector<128x128xf32>
    %20 = vector.shape_cast %19 : vector<128x128xf32> to vector<8x16x128xf32>
    %c16_i32 = arith.constant 16 : i32
    %21 = arith.muli %arg1, %c16_i32 : i32
    %22 = tpu.iota {dimensions = array<i32: 1>} : vector<1x16x1xi32>
    %23 = vector.broadcast %21 : i32 to vector<1x16x1xi32>
    %24 = arith.addi %23, %22 : vector<1x16x1xi32>
    %c8_i32 = arith.constant 8 : i32
    %25 = vector.broadcast %c8_i32 : i32 to vector<1x16x1xi32>
    %26 = arith.cmpi slt, %24, %25 : vector<1x16x1xi32>
    %cst_14 = arith.constant 0xFF800000 : f32
    %27 = vector.shape_cast %26 : vector<1x16x1xi1> to vector<1x16x1xi1>
    %28 = vector.broadcast %27 : vector<1x16x1xi1> to vector<8x16x128xi1>
    %29 = vector.broadcast %cst_14 : f32 to vector<8x16x128xf32>
    %30 = arith.select %28, %20, %29 : vector<8x16x128xi1>, vector<8x16x128xf32>
    %c0_15 = arith.constant 0 : index
    %c0_16 = arith.constant 0 : index
    %31 = vector.load %arg12[%c0_15, %c0_16] : memref<8x128xf32, #tpu.memory_space<vmem>>, vector<8x128xf32>
    %cst_17 = arith.constant dense<0xFF800000> : vector<8x128xf32>
    %32 = vector.multi_reduction <maximumf>, %30, %cst_17 [1] : vector<8x16x128xf32> to vector<8x128xf32>
    %33 = arith.maximumf %31, %32 : vector<8x128xf32>
    %c0_18 = arith.constant 0 : index
    %c0_19 = arith.constant 0 : index
    %34 = vector.load %arg12[%c0_18, %c0_19] : memref<8x128xf32, #tpu.memory_space<vmem>>, vector<8x128xf32>
    tpu.vector_store %arg12[%c0_18, %c0_19], %33 {strides = array<i32>} : memref<8x128xf32, #tpu.memory_space<vmem>>, vector<8x128xf32>,
    %c0_i32_20 = arith.constant 0 : i32
    %35 = arith.cmpi eq, %arg1, %c0_i32_20 : i32
    %36 = arith.extui %35 : i1 to i32
    %c0_i32_21 = arith.constant 0 : i32
    %37 = arith.cmpi ne, %36, %c0_i32_21 : i32
    scf.if %37 {
      %c0_22 = arith.constant 0 : index
      %c0_23 = arith.constant 0 : index
      %38 = vector.load %arg12[%c0_22, %c0_23] : memref<8x128xf32, #tpu.memory_space<vmem>>, vector<8x128xf32>
      %39 = arith.truncf %38 : vector<8x128xf32> to vector<8x128xbf16>
      %c0_24 = arith.constant 0 : index
      %c0_25 = arith.constant 0 : index
      %40 = vector.load %arg7[%c0_24, %c0_25] : memref<128x128xbf16, #tpu.memory_space<vmem>>, vector<128x128xbf16>
      %cst_26 = arith.constant dense<0.000000e+00> : vector<8x128xf32>
      %41 = tpu.matmul %39, %40, %cst_26 {dimension_numbers = #tpu.dot_dimension_numbers<[1], [0], [0], [1], [0, 0, 1, 1], [], []>} : vector<8x128xbf16>, vector<128x128xbf16>, vector<8x128xf32> -> vector<8x128xf32>
      %c0_27 = arith.constant 0 : index
      %c0_28 = arith.constant 0 : index
      %42 = vector.load %arg8[%c0_27, %c0_28] : memref<1x128xf32, #tpu.memory_space<vmem>>, vector<1x128xf32>
      %43 = vector.broadcast %42 : vector<1x128xf32> to vector<8x128xf32>
      %44 = arith.addf %41, %43 : vector<8x128xf32>
      %cst_29 = arith.constant 0.000000e+00 : f32
      %45 = vector.broadcast %cst_29 : f32 to vector<8x128xf32>
      %46 = arith.maximumf %44, %45 : vector<8x128xf32>
      %c0_30 = arith.constant 0 : index
      %c0_31 = arith.constant 0 : index
      %47 = vector.load %arg9[%c0_30, %c0_31] : memref<1x128xf32, #tpu.memory_space<vmem>>, vector<1x128xf32>
      %48 = vector.broadcast %47 : vector<1x128xf32> to vector<8x128xf32>
      %49 = arith.mulf %46, %48 : vector<8x128xf32>
      %cst_32 = arith.constant dense<0.000000e+00> : vector<8xf32>
      %50 = vector.multi_reduction <add>, %49, %cst_32 [1] : vector<8x128xf32> to vector<8xf32>
      %51 = vector.shape_cast %50 : vector<8xf32> to vector<8x1xf32>
      %c0_33 = arith.constant 0 : index
      %c0_34 = arith.constant 0 : index
      %52 = vector.load %arg10[%c0_33, %c0_34] : memref<1x1xf32, #tpu.memory_space<vmem>>, vector<1x1xf32>
      %53 = vector.broadcast %52 : vector<1x1xf32> to vector<8x1xf32>
      %54 = arith.addf %51, %53 : vector<8x1xf32>
      %cst_35 = arith.constant 0.000000e+00 : f32
      %55 = vector.broadcast %cst_35 : f32 to vector<8x1xf32>
      %56 = arith.minimumf %54, %55 : vector<8x1xf32>
      %57 = math.absf %54 : vector<8x1xf32>
      %cst_36 = arith.constant 0.000000e+00 : f32
      %58 = vector.broadcast %cst_36 : f32 to vector<8x1xf32>
      %59 = arith.subf %58, %57 : vector<8x1xf32>
      %60 = math.exp %59 : vector<8x1xf32>
      %cst_37 = arith.constant 1.000000e+00 : f32
      %61 = vector.broadcast %cst_37 : f32 to vector<8x1xf32>
      %62 = arith.addf %61, %60 : vector<8x1xf32>
      %63 = math.log %62 : vector<8x1xf32>
      %64 = arith.subf %56, %63 : vector<8x1xf32>
      %65 = vector.shape_cast %64 : vector<8x1xf32> to vector<1x8x1xf32>
      %66 = vector.shape_cast %65 : vector<1x8x1xf32> to vector<1x8x1xf32>
      %67 = vector.broadcast %66 : vector<1x8x1xf32> to vector<1x8x128xf32>
      %c0_38 = arith.constant 0 : index
      %c0_39 = arith.constant 0 : index
      %c0_40 = arith.constant 0 : index
      %68 = vector.load %arg11[%c0_38, %c0_39, %c0_40] : memref<1x8x128xf32, #tpu.memory_space<vmem>>, vector<1x8x128xf32>
      tpu.vector_store %arg11[%c0_38, %c0_39, %c0_40], %67 {strides = array<i32>} : memref<1x8x128xf32, #tpu.memory_space<vmem>>, vector<1x8x128xf32>,
    } else {
    }
    return
  }
  func.func @transform_0(%arg0: i32, %arg1: i32) -> (i32, i32, i32) {
    %c0_i32 = arith.constant 0 : i32
    %c0_i32_0 = arith.constant 0 : i32
    return %arg0, %arg1, %c0_i32 : i32, i32, i32
  }
  func.func @transform_1(%arg0: i32, %arg1: i32) -> (i32, i32) {
    %c0_i32 = arith.constant 0 : i32
    %c0_i32_0 = arith.constant 0 : i32
    %c0_i32_1 = arith.constant 0 : i32
    return %c0_i32, %c0_i32_0 : i32, i32
  }
  func.func @transform_2(%arg0: i32, %arg1: i32) -> (i32, i32) {
    %c0_i32 = arith.constant 0 : i32
    %c0_i32_0 = arith.constant 0 : i32
    %c0_i32_1 = arith.constant 0 : i32
    return %c0_i32, %c0_i32_0 : i32, i32
  }
  func.func @transform_3(%arg0: i32, %arg1: i32) -> (i32, i32) {
    %c0_i32 = arith.constant 0 : i32
    %c0_i32_0 = arith.constant 0 : i32
    %c0_i32_1 = arith.constant 0 : i32
    return %c0_i32, %c0_i32_0 : i32, i32
  }
  func.func @transform_4(%arg0: i32, %arg1: i32) -> (i32, i32) {
    %c0_i32 = arith.constant 0 : i32
    %c0_i32_0 = arith.constant 0 : i32
    %c0_i32_1 = arith.constant 0 : i32
    return %c0_i32, %c0_i32_0 : i32, i32
  }
  func.func @transform_5(%arg0: i32, %arg1: i32) -> (i32, i32) {
    %c0_i32 = arith.constant 0 : i32
    %c0_i32_0 = arith.constant 0 : i32
    %c0_i32_1 = arith.constant 0 : i32
    return %c0_i32, %c0_i32_0 : i32, i32
  }
  func.func @transform_6(%arg0: i32, %arg1: i32) -> (i32, i32) {
    %c0_i32 = arith.constant 0 : i32
    %c0_i32_0 = arith.constant 0 : i32
    %c0_i32_1 = arith.constant 0 : i32
    return %c0_i32, %c0_i32_0 : i32, i32
  }
  func.func @transform_7(%arg0: i32, %arg1: i32) -> (i32, i32) {
    %c0_i32 = arith.constant 0 : i32
    %c0_i32_0 = arith.constant 0 : i32
    %c0_i32_1 = arith.constant 0 : i32
    return %c0_i32, %c0_i32_0 : i32, i32
  }
  func.func @transform_8(%arg0: i32, %arg1: i32) -> (i32, i32) {
    %c0_i32 = arith.constant 0 : i32
    %c0_i32_0 = arith.constant 0 : i32
    %c0_i32_1 = arith.constant 0 : i32
    return %c0_i32, %c0_i32_0 : i32, i32
  }
  func.func @transform_9(%arg0: i32, %arg1: i32) -> (i32, i32, i32) {
    %c0_i32 = arith.constant 0 : i32
    %c0_i32_0 = arith.constant 0 : i32
    %c0_i32_1 = arith.constant 0 : i32
    return %arg0, %c0_i32, %c0_i32_0 : i32, i32, i32
  }
}

</mosaic_0001>

<llo_original>
// kernel: tpu_custom_call.1
$region0: #{tpu_custom_call.1}
  #allocation0 [shape = 'u32[]', space=smem, size = 0x4, offset = 0x4, fixed_abs, tag = 'smem constant byte address 0x4 - core index']
  #allocation1 [shape = 'u32[144,128]{1,0:T(1,128)}', space=vmem, size = 0x12000, scoped, tag = 'internal scratch']
  #allocation2 [shape = 'f32[8,128]{1,0:T(8,128)}', space=vmem, size = 0x1000, scoped, tag = 'scratch operand']
  #allocation3 [shape = 'f32[1,1]{1,0:T(1,128)S(1)}', space=vmem, size = 0x200, scoped, tag = 'scoped memory for tpu_custom_call.1']
  %s0 = inlined_call_operand.hbm [shape: bf16[8,16,32], index: 0, kind: input, shape index: {}]
  %s1 = inlined_call_operand.hbm [shape: bf16[32,128], index: 1, kind: input, shape index: {}]
  %s2 = inlined_call_operand.vmem [shape: f32[1,128], index: 2, kind: input, shape index: {}]
  %s3 = inlined_call_operand.hbm [shape: bf16[128,128], index: 3, kind: input, shape index: {}]
  %s4 = inlined_call_operand.vmem [shape: f32[1,128], index: 4, kind: input, shape index: {}]
  %s5 = inlined_call_operand.hbm [shape: bf16[128,128], index: 5, kind: input, shape index: {}]
  %s6 = inlined_call_operand.vmem [shape: f32[1,128], index: 6, kind: input, shape index: {}]
  %s7 = inlined_call_operand.vmem [shape: f32[1,128], index: 7, kind: input, shape index: {}]
  %s8 = inlined_call_operand.<no memory space> [shape: f32[1,1], index: 8, kind: input, shape index: {}]
  %s9 = inlined_call_operand.hbm [shape: f32[1,8,128], index: 9, kind: output, shape index: {}]
  %s10 = sld [smem:[#allocation0]]
  $region70: #{tpu_custom_call.1} parent=0
    _
  %s12 = ssub.s32 1, %s10
  %s13 = scalar_select 0, %s12, %s10
  %v14 = vstv %s8
  %15 = vst [vmem:[#allocation3] sm:$0x1] %v14
  $region1: #{tpu_custom_call.1} parent=0
    #allocation4 [shape = 'u8[32768]{0}', space=vmem, size = 0x8000, scoped, tag = 'input window, operand 0, single buffered']
    #allocation5 [shape = 's32[1]{0}', space=sflag, size = 0x4, scoped, tag = 'scoped memory for tpu_custom_call.1']
    #allocation6 [shape = 's32[1]{0}', space=sflag, size = 0x4, scoped, tag = 'scoped memory for tpu_custom_call.1']
    #allocation7 [shape = 'u8[8192]{0}', space=vmem, size = 0x2000, scoped, tag = 'input window, operand 1, single buffered']
    #allocation8 [shape = 's32[1]{0}', space=sflag, size = 0x4, scoped, tag = 'scoped memory for tpu_custom_call.1']
    #allocation9 [shape = 'u8[32768]{0}', space=vmem, size = 0x8000, scoped, tag = 'input window, operand 3, single buffered']
    #allocation10 [shape = 'u8[32768]{0}', space=vmem, size = 0x8000, scoped, tag = 'input window, operand 5, single buffered']
    #allocation11 [shape = 's32[1]{0}', space=sflag, size = 0x4, scoped, tag = 'scoped memory for tpu_custom_call.1']
    #allocation12 [shape = 'u8[4096]{0}', space=vmem, size = 0x1000, scoped, tag = 'output window, operand 0, single buffered']
    %16 = vsyncpa [#allocation5], 0
    %17 = vsyncpa [#allocation8], 0
    %18 = vsyncpa [#allocation11], 0
    %19 = vsyncpa [#allocation6], 0
    // Predicated region
    $region2: #{tpu_custom_call.1} parent=1 // pred_check
      _
    $region3: #{tpu_custom_call.1} parent=1 // pred_check_branch
      %21 = sbr.rel (0) target = $region5
    $region4: #{tpu_custom_call.1} parent=1 // pred_region
      %s23 = ssub.s32 1024, 1024
      %24 = vsyncadd [#allocation5], %s23
      %s25 = sshll.u32 [#allocation4], 4
      %s26 = int_to_ptr.vmem [resolvable:$true] %s25
      %31 = dma.hbm_to_vmem [thread:$0]  %s0, 1024, %s26, [#allocation5], 64, 64, 4
    $region5: #{tpu_custom_call.1} parent=1 // pred_fallthru
      _
    // Predicated region
    $region6: #{tpu_custom_call.1} parent=1 // pred_check
      _
    $region7: #{tpu_custom_call.1} parent=1 // pred_check_branch
      %33 = sbr.rel (0) target = $region9
    $region8: #{tpu_custom_call.1} parent=1 // pred_region
      %s35 = ssub.s32 256, 256
      %36 = vsyncadd [#allocation8], %s35
      %s37 = sshll.u32 [#allocation7], 4
      %s38 = int_to_ptr.vmem [resolvable:$true] %s37
      %43 = dma.hbm_to_vmem [thread:$0]  %s1, 256, %s38, [#allocation8], 64, 64, 4
    $region9: #{tpu_custom_call.1} parent=1 // pred_fallthru
      _
    // Predicated region
    $region10: #{tpu_custom_call.1} parent=1 // pred_check
      _
    $region11: #{tpu_custom_call.1} parent=1 // pred_check_branch
      %45 = sbr.rel (0) target = $region13
    $region12: #{tpu_custom_call.1} parent=1 // pred_region
      _
    $region13: #{tpu_custom_call.1} parent=1 // pred_fallthru
      _
    // Predicated region
    $region14: #{tpu_custom_call.1} parent=1 // pred_check
      _
    $region15: #{tpu_custom_call.1} parent=1 // pred_check_branch
      %47 = sbr.rel (0) target = $region17
    $region16: #{tpu_custom_call.1} parent=1 // pred_region
      %s49 = ssub.s32 1024, 1024
      %50 = vsyncadd [#allocation8], %s49
      %s51 = sshll.u32 [#allocation9], 4
      %s52 = int_to_ptr.vmem [resolvable:$true] %s51
      %57 = dma.hbm_to_vmem [thread:$0]  %s3, 1024, %s52, [#allocation8], 64, 64, 4
    $region17: #{tpu_custom_call.1} parent=1 // pred_fallthru
      _
    // Predicated region
    $region18: #{tpu_custom_call.1} parent=1 // pred_check
      _
    $region19: #{tpu_custom_call.1} parent=1 // pred_check_branch
      %59 = sbr.rel (0) target = $region21
    $region20: #{tpu_custom_call.1} parent=1 // pred_region
      _
    $region21: #{tpu_custom_call.1} parent=1 // pred_fallthru
      _
    // Predicated region
    $region22: #{tpu_custom_call.1} parent=1 // pred_check
      _
    $region23: #{tpu_custom_call.1} parent=1 // pred_check_branch
      %61 = sbr.rel (0) target = $region25
    $region24: #{tpu_custom_call.1} parent=1 // pred_region
      %s63 = ssub.s32 1024, 1024
      %64 = vsyncadd [#allocation11], %s63
      %s65 = sshll.u32 [#allocation10], 4
      %s66 = int_to_ptr.vmem [resolvable:$true] %s65
      %71 = dma.hbm_to_vmem [thread:$0]  %s5, 1024, %s66, [#allocation11], 64, 64, 4
    $region25: #{tpu_custom_call.1} parent=1 // pred_fallthru
      _
    // Predicated region
    $region26: #{tpu_custom_call.1} parent=1 // pred_check
      _
    $region27: #{tpu_custom_call.1} parent=1 // pred_check_branch
      %73 = sbr.rel (0) target = $region29
    $region28: #{tpu_custom_call.1} parent=1 // pred_region
      _
    $region29: #{tpu_custom_call.1} parent=1 // pred_fallthru
      _
    // Predicated region
    $region30: #{tpu_custom_call.1} parent=1 // pred_check
      _
    $region31: #{tpu_custom_call.1} parent=1 // pred_check_branch
      %75 = sbr.rel (0) target = $region33
    $region32: #{tpu_custom_call.1} parent=1 // pred_region
      _
    $region33: #{tpu_custom_call.1} parent=1 // pred_fallthru
      _
    // Predicated region
    $region34: #{tpu_custom_call.1} parent=1 // pred_check
      _
    $region35: #{tpu_custom_call.1} parent=1 // pred_check_branch
      %77 = sbr.rel (0) target = $region37
    $region36: #{tpu_custom_call.1} parent=1 // pred_region
      _
    $region37: #{tpu_custom_call.1} parent=1 // pred_fallthru
      _
    // Predicated region
    $region38: #{tpu_custom_call.1} parent=1 // pred_check
      _
    $region39: #{tpu_custom_call.1} parent=1 // pred_check_branch
      %79 = sbr.rel (0) target = $region41
    $region40: #{tpu_custom_call.1} parent=1 // pred_region
      %80 = dma.done [#allocation5], 1024
    $region41: #{tpu_custom_call.1} parent=1 // pred_fallthru
      _
    // Predicated region
    $region42: #{tpu_custom_call.1} parent=1 // pred_check
      _
    $region43: #{tpu_custom_call.1} parent=1 // pred_check_branch
      %82 = sbr.rel (0) target = $region45
    $region44: #{tpu_custom_call.1} parent=1 // pred_region
      %83 = dma.done [#allocation8], 256
    $region45: #{tpu_custom_call.1} parent=1 // pred_fallthru
      _
    // Predicated region
    $region46: #{tpu_custom_call.1} parent=1 // pred_check
      _
    $region47: #{tpu_custom_call.1} parent=1 // pred_check_branch
      %85 = sbr.rel (0) target = $region49
    $region48: #{tpu_custom_call.1} parent=1 // pred_region
      %86 = dma.done [#allocation8], 1024
    $region49: #{tpu_custom_call.1} parent=1 // pred_fallthru
      _
    // Predicated region
    $region50: #{tpu_custom_call.1} parent=1 // pred_check
      _
    $region51: #{tpu_custom_call.1} parent=1 // pred_check_branch
      %88 = sbr.rel (0) target = $region53
    $region52: #{tpu_custom_call.1} parent=1 // pred_region
      %89 = dma.done [#allocation11], 1024
    $region53: #{tpu_custom_call.1} parent=1 // pred_fallthru
      _
    %p91 = scmp.eq.s32.totalorder 0, 0
    // Predicated region
    $region54: #{tpu_custom_call.1} parent=1 // pred_check
      %p92 = pneg %p91
    $region55: #{tpu_custom_call.1} parent=1 // pred_check_branch
      %94 = sbr.rel (%p92) target = $region57
    $region56: #{tpu_custom_call.1} parent=1 // pred_region
      %95 = vst [vmem:[#allocation2] sm:$0xff] -inf
    $region57: #{tpu_custom_call.1} parent=1 // pred_fallthru
      _
    %v96 = vld [vmem:[#allocation4] sm:$0xf]
    %v97 = vld [vmem:[#allocation4 + $0x4] sm:$0xf]
    %v98 = vld [vmem:[#allocation4 + $0x8] sm:$0xf]
    %v99 = vld [vmem:[#allocation4 + $0xc] sm:$0xf]
    %v100 = vld [vmem:[#allocation4 + $0x10] sm:$0xf]
    %v101 = vld [vmem:[#allocation4 + $0x14] sm:$0xf]
    %v102 = vld [vmem:[#allocation4 + $0x18] sm:$0xf]
    %v103 = vld [vmem:[#allocation4 + $0x1c] sm:$0xf]
    %v104 = vld [vmem:[#allocation4 + $0x20] sm:$0xf]
    %v105 = vld [vmem:[#allocation4 + $0x24] sm:$0xf]
    %v106 = vld [vmem:[#allocation4 + $0x28] sm:$0xf]
    %v107 = vld [vmem:[#allocation4 + $0x2c] sm:$0xf]
    %v108 = vld [vmem:[#allocation4 + $0x30] sm:$0xf]
    %v109 = vld [vmem:[#allocation4 + $0x34] sm:$0xf]
    %v110 = vld [vmem:[#allocation4 + $0x38] sm:$0xf]
    %v111 = vld [vmem:[#allocation4 + $0x3c] sm:$0xf]
    %v112 = vld [vmem:[#allocation7] sm:$0xf]
    %v113 = vld [vmem:[#allocation7 + $0x4] sm:$0xf]
    %v114 = vld [vmem:[#allocation7 + $0x8] sm:$0xf]
    %v115 = vld [vmem:[#allocation7 + $0xc] sm:$0xf]
    %v116 = vld [vmem:[%s2] sm:$0x1]
    %v118 = vlaneseq
    %v119 = vshrl.u32 %v118, 7
    %v120 = vsub.s32 0, %v119
    %v121 = vrot.slane %v116, %v120
    %v139 = vunpack.c.l.b16 %v96
    %v140 = vunpack.c.l.b16 %v97
    %v141 = vunpack.c.l.b16 %v98
    %v142 = vunpack.c.l.b16 %v99
    %v143 = vunpack.c.l.b16 %v100
    %v144 = vunpack.c.l.b16 %v101
    %v145 = vunpack.c.l.b16 %v102
    %v146 = vunpack.c.l.b16 %v103
    %v147 = vunpack.c.l.b16 %v104
    %v148 = vunpack.c.l.b16 %v105
    %v149 = vunpack.c.l.b16 %v106
    %v150 = vunpack.c.l.b16 %v107
    %v151 = vunpack.c.l.b16 %v108
    %v152 = vunpack.c.l.b16 %v109
    %v153 = vunpack.c.l.b16 %v110
    %v154 = vunpack.c.l.b16 %v111
    %v155 = vpack.c.b16 %v140, %v139
    %v156 = vpack.c.b16 %v142, %v141
    %v157 = vpack.c.b16 %v144, %v143
    %v158 = vpack.c.b16 %v146, %v145
    %v159 = vpack.c.b16 %v148, %v147
    %v160 = vpack.c.b16 %v150, %v149
    %v161 = vpack.c.b16 %v152, %v151
    %v162 = vpack.c.b16 %v154, %v153
    %v167 = vunpack.c.l.b16 %v112
    %v168 = vunpack.c.l.b16 %v113
    %v169 = vunpack.c.l.b16 %v114
    %v170 = vunpack.c.l.b16 %v115
    %v171 = vpack.c.b16 %v168, %v167
    %v172 = vpack.c.b16 %v170, %v169
    %vm175 = vcmask 261120
    %v177 = vsel %vm175, %v155, 0
    %v180 = vsel %vm175, %v156, 0
    %v183 = vsel %vm175, %v157, 0
    %v186 = vsel %vm175, %v158, 0
    %v189 = vsel %vm175, %v159, 0
    %v192 = vsel %vm175, %v160, 0
    %v195 = vsel %vm175, %v161, 0
    %v198 = vsel %vm175, %v162, 0
    %200 = vmatprep.subr.bf16.mxu0 0
    %201 = vmatpush1.bf16.msra.mxu0 %v171
    %202 = vmatprep.subr.bf16.mxu0 0
    %203 = vmatpush1.bf16.msra.mxu0 %v172
    %204 = vmatprep.subr.bf16.mxu0 0
    %205 = vmatpush1.bf16.msra.mxu0 0
    %206 = vmatprep.subr.bf16.mxu0 0
    %207 = vmatpush1.bf16.msra.mxu0 0
    %208 = vmatprep.subr.bf16.mxu0 0
    %209 = vmatpush1.bf16.msra.mxu0 0
    %210 = vmatprep.subr.bf16.mxu0 0
    %211 = vmatpush1.bf16.msra.mxu0 0
    %212 = vmatprep.subr.bf16.mxu0 0
    %213 = vmatpush1.bf16.msra.mxu0 0
    %214 = vmatprep.subr.bf16.mxu0 0
    %215 = vmatpush1.bf16.msra.mxu0 0
    %216 = vmatprep.subr.bf16.mxu0 0
    %217 = vmatpush1.bf16.msra.mxu0 0
    %218 = vmatprep.subr.bf16.mxu0 0
    %219 = vmatpush1.bf16.msra.mxu0 0
    %220 = vmatprep.subr.bf16.mxu0 0
    %221 = vmatpush1.bf16.msra.mxu0 0
    %222 = vmatprep.subr.bf16.mxu0 0
    %223 = vmatpush1.bf16.msra.mxu0 0
    %224 = vmatprep.subr.bf16.mxu0 0
    %225 = vmatpush1.bf16.msra.mxu0 0
    %226 = vmatprep.subr.bf16.mxu0 0
    %227 = vmatpush1.bf16.msra.mxu0 0
    %228 = vmatprep.subr.bf16.mxu0 0
    %229 = vmatpush1.bf16.msra.mxu0 0
    %230 = vmatprep.subr.bf16.mxu0 0
    %231 = vmatpush1.bf16.msra.mxu0 0
    %232 = vmatprep.mubr.bf16.mxu0 0
    %233 = vmatmul.mubr.bf16.gmra.mrb[0].mxu0 %v177
    %v234 = vpop.f32.mrb[0].mxu0
    %v235 = vadd.f32 %v121, %v234
    %v236 = vpop.f32.mrb[0].mxu0
    %v237 = vpop.f32.mrb[0].mxu0
    %v238 = vadd.f32 %v121, %v237
    %v239 = vpop.f32.mrb[0].mxu0
    %240 = vmatprep.mubr.bf16.mxu0 0
    %241 = vmatmul.mubr.bf16.gmra.mrb[0].mxu0 %v180
    %v242 = vpop.f32.mrb[0].mxu0
    %v243 = vadd.f32 %v121, %v242
    %v244 = vpop.f32.mrb[0].mxu0
    %v245 = vpop.f32.mrb[0].mxu0
    %v246 = vadd.f32 %v121, %v245
    %v247 = vpop.f32.mrb[0].mxu0
    %248 = vmatprep.mubr.bf16.mxu0 0
    %249 = vmatmul.mubr.bf16.gmra.mrb[0].mxu0 %v183
    %v250 = vpop.f32.mrb[0].mxu0
    %v251 = vadd.f32 %v121, %v250
    %v252 = vpop.f32.mrb[0].mxu0
    %v253 = vpop.f32.mrb[0].mxu0
    %v254 = vadd.f32 %v121, %v253
    %v255 = vpop.f32.mrb[0].mxu0
    %256 = vmatprep.mubr.bf16.mxu0 0
    %257 = vmatmul.mubr.bf16.gmra.mrb[0].mxu0 %v186
    %v258 = vpop.f32.mrb[0].mxu0
    %v259 = vadd.f32 %v121, %v258
    %v260 = vpop.f32.mrb[0].mxu0
    %v261 = vpop.f32.mrb[0].mxu0
    %v262 = vadd.f32 %v121, %v261
    %v263 = vpop.f32.mrb[0].mxu0
    %264 = vmatprep.mubr.bf16.mxu0 0
    %265 = vmatmul.mubr.bf16.gmra.mrb[0].mxu0 %v189
    %v266 = vpop.f32.mrb[0].mxu0
    %v267 = vadd.f32 %v121, %v266
    %v268 = vpop.f32.mrb[0].mxu0
    %v269 = vpop.f32.mrb[0].mxu0
    %v270 = vadd.f32 %v121, %v269
    %v271 = vpop.f32.mrb[0].mxu0
    %272 = vmatprep.mubr.bf16.mxu0 0
    %273 = vmatmul.mubr.bf16.gmra.mrb[0].mxu0 %v192
    %v274 = vpop.f32.mrb[0].mxu0
    %v275 = vadd.f32 %v121, %v274
    %v276 = vpop.f32.mrb[0].mxu0
    %v277 = vpop.f32.mrb[0].mxu0
    %v278 = vadd.f32 %v121, %v277
    %v279 = vpop.f32.mrb[0].mxu0
    %280 = vmatprep.mubr.bf16.mxu0 0
    %281 = vmatmul.mubr.bf16.gmra.mrb[0].mxu0 %v195
    %v282 = vpop.f32.mrb[0].mxu0
    %v283 = vadd.f32 %v121, %v282
    %v284 = vpop.f32.mrb[0].mxu0
    %v285 = vpop.f32.mrb[0].mxu0
    %v286 = vadd.f32 %v121, %v285
    %v287 = vpop.f32.mrb[0].mxu0
    %288 = vmatprep.mubr.bf16.mxu0 0
    %289 = vmatmul.mubr.bf16.gmra.mrb[0].mxu0 %v198
    %v290 = vpop.f32.mrb[0].mxu0
    %v291 = vadd.f32 %v121, %v290
    %v292 = vpop.f32.mrb[0].mxu0
    %v293 = vpop.f32.mrb[0].mxu0
    %v294 = vadd.f32 %v121, %v293
    %v295 = vpop.f32.mrb[0].mxu0
    %296 = vdwg.mxu0
    %v297 = vmax.f32 %v235, 0.0
    %v298 = vmax.f32 %v238, 0.0
    %v299 = vmax.f32 %v243, 0.0
    %v300 = vmax.f32 %v246, 0.0
    %v301 = vmax.f32 %v251, 0.0
    %v302 = vmax.f32 %v254, 0.0
    %v303 = vmax.f32 %v259, 0.0
    %v304 = vmax.f32 %v262, 0.0
    %v305 = vmax.f32 %v267, 0.0
    %v306 = vmax.f32 %v270, 0.0
    %v307 = vmax.f32 %v275, 0.0
    %v308 = vmax.f32 %v278, 0.0
    %v309 = vmax.f32 %v283, 0.0
    %v310 = vmax.f32 %v286, 0.0
    %v311 = vmax.f32 %v291, 0.0
    %v312 = vmax.f32 %v294, 0.0
    %v313 = vpack.c.bf16 %v298, %v297
    %v314 = vpack.c.bf16 %v300, %v299
    %v315 = vpack.c.bf16 %v302, %v301
    %v316 = vpack.c.bf16 %v304, %v303
    %v317 = vpack.c.bf16 %v306, %v305
    %v318 = vpack.c.bf16 %v308, %v307
    %v319 = vpack.c.bf16 %v310, %v309
    %v320 = vpack.c.bf16 %v312, %v311
    %v321 = vld [vmem:[#allocation9] sm:$0xf]
    %v322 = vld [vmem:[#allocation9 + $0x4] sm:$0xf]
    %v323 = vld [vmem:[#allocation9 + $0x8] sm:$0xf]
    %v324 = vld [vmem:[#allocation9 + $0xc] sm:$0xf]
    %v325 = vld [vmem:[#allocation9 + $0x10] sm:$0xf]
    %v326 = vld [vmem:[#allocation9 + $0x14] sm:$0xf]
    %v327 = vld [vmem:[#allocation9 + $0x18] sm:$0xf]
    %v328 = vld [vmem:[#allocation9 + $0x1c] sm:$0xf]
    %v329 = vld [vmem:[#allocation9 + $0x20] sm:$0xf]
    %v330 = vld [vmem:[#allocation9 + $0x24] sm:$0xf]
    %v331 = vld [vmem:[#allocation9 + $0x28] sm:$0xf]
    %v332 = vld [vmem:[#allocation9 + $0x2c] sm:$0xf]
    %v333 = vld [vmem:[#allocation9 + $0x30] sm:$0xf]
    %v334 = vld [vmem:[#allocation9 + $0x34] sm:$0xf]
    %v335 = vld [vmem:[#allocation9 + $0x38] sm:$0xf]
    %v336 = vld [vmem:[#allocation9 + $0x3c] sm:$0xf]
    %v337 = vld [vmem:[%s4] sm:$0x1]
    %v339 = vlaneseq
    %v340 = vshrl.u32 %v339, 7
    %v341 = vsub.s32 0, %v340
    %v342 = vrot.slane %v337, %v341
    %v360 = vunpack.c.l.b16 %v321
    %v361 = vunpack.c.l.b16 %v322
    %v362 = vunpack.c.l.b16 %v323
    %v363 = vunpack.c.l.b16 %v324
    %v364 = vunpack.c.l.b16 %v325
    %v365 = vunpack.c.l.b16 %v326
    %v366 = vunpack.c.l.b16 %v327
    %v367 = vunpack.c.l.b16 %v328
    %v368 = vunpack.c.l.b16 %v329
    %v369 = vunpack.c.l.b16 %v330
    %v370 = vunpack.c.l.b16 %v331
    %v371 = vunpack.c.l.b16 %v332
    %v372 = vunpack.c.l.b16 %v333
    %v373 = vunpack.c.l.b16 %v334
    %v374 = vunpack.c.l.b16 %v335
    %v375 = vunpack.c.l.b16 %v336
    %v376 = vpack.c.b16 %v361, %v360
    %v377 = vpack.c.b16 %v363, %v362
    %v378 = vpack.c.b16 %v365, %v364
    %v379 = vpack.c.b16 %v367, %v366
    %v380 = vpack.c.b16 %v369, %v368
    %v381 = vpack.c.b16 %v371, %v370
    %v382 = vpack.c.b16 %v373, %v372
    %v383 = vpack.c.b16 %v375, %v374
    %392 = vmatprep.subr.bf16.mxu0 0
    %393 = vmatpush1.bf16.msra.mxu0 %v376
    %394 = vmatprep.subr.bf16.mxu0 0
    %395 = vmatpush1.bf16.msra.mxu0 %v377
    %396 = vmatprep.subr.bf16.mxu0 0
    %397 = vmatpush1.bf16.msra.mxu0 %v378
    %398 = vmatprep.subr.bf16.mxu0 0
    %399 = vmatpush1.bf16.msra.mxu0 %v379
    %400 = vmatprep.subr.bf16.mxu0 0
    %401 = vmatpush1.bf16.msra.mxu0 %v380
    %402 = vmatprep.subr.bf16.mxu0 0
    %403 = vmatpush1.bf16.msra.mxu0 %v381
    %404 = vmatprep.subr.bf16.mxu0 0
    %405 = vmatpush1.bf16.msra.mxu0 %v382
    %406 = vmatprep.subr.bf16.mxu0 0
    %407 = vmatpush1.bf16.msra.mxu0 %v383
    %408 = vmatprep.subr.bf16.mxu0 0
    %409 = vmatpush1.bf16.msra.mxu0 0
    %410 = vmatprep.subr.bf16.mxu0 0
    %411 = vmatpush1.bf16.msra.mxu0 0
    %412 = vmatprep.subr.bf16.mxu0 0
    %413 = vmatpush1.bf16.msra.mxu0 0
    %414 = vmatprep.subr.bf16.mxu0 0
    %415 = vmatpush1.bf16.msra.mxu0 0
    %416 = vmatprep.subr.bf16.mxu0 0
    %417 = vmatpush1.bf16.msra.mxu0 0
    %418 = vmatprep.subr.bf16.mxu0 0
    %419 = vmatpush1.bf16.msra.mxu0 0
    %420 = vmatprep.subr.bf16.mxu0 0
    %421 = vmatpush1.bf16.msra.mxu0 0
    %422 = vmatprep.subr.bf16.mxu0 0
    %423 = vmatpush1.bf16.msra.mxu0 0
    %424 = vmatprep.mubr.bf16.mxu0 0
    %425 = vmatmul.mubr.bf16.gmra.mrb[0].mxu0 %v313
    %v426 = vpop.f32.mrb[0].mxu0
    %v427 = vadd.f32 %v342, %v426
    %v428 = vpop.f32.mrb[0].mxu0
    %v429 = vpop.f32.mrb[0].mxu0
    %v430 = vadd.f32 %v342, %v429
    %v431 = vpop.f32.mrb[0].mxu0
    %432 = vmatprep.mubr.bf16.mxu0 0
    %433 = vmatmul.mubr.bf16.gmra.mrb[0].mxu0 %v314
    %v434 = vpop.f32.mrb[0].mxu0
    %v435 = vadd.f32 %v342, %v434
    %v436 = vpop.f32.mrb[0].mxu0
    %v437 = vpop.f32.mrb[0].mxu0
    %v438 = vadd.f32 %v342, %v437
    %v439 = vpop.f32.mrb[0].mxu0
    %440 = vmatprep.mubr.bf16.mxu0 0
    %441 = vmatmul.mubr.bf16.gmra.mrb[0].mxu0 %v315
    %v442 = vpop.f32.mrb[0].mxu0
    %v443 = vadd.f32 %v342, %v442
    %v444 = vpop.f32.mrb[0].mxu0
    %v445 = vpop.f32.mrb[0].mxu0
    %v446 = vadd.f32 %v342, %v445
    %v447 = vpop.f32.mrb[0].mxu0
    %448 = vmatprep.mubr.bf16.mxu0 0
    %449 = vmatmul.mubr.bf16.gmra.mrb[0].mxu0 %v316
    %v450 = vpop.f32.mrb[0].mxu0
    %v451 = vadd.f32 %v342, %v450
    %v452 = vpop.f32.mrb[0].mxu0
    %v453 = vpop.f32.mrb[0].mxu0
    %v454 = vadd.f32 %v342, %v453
    %v455 = vpop.f32.mrb[0].mxu0
    %456 = vmatprep.mubr.bf16.mxu0 0
    %457 = vmatmul.mubr.bf16.gmra.mrb[0].mxu0 %v317
    %v458 = vpop.f32.mrb[0].mxu0
    %v459 = vadd.f32 %v342, %v458
    %v460 = vpop.f32.mrb[0].mxu0
    %v461 = vpop.f32.mrb[0].mxu0
    %v462 = vadd.f32 %v342, %v461
    %v463 = vpop.f32.mrb[0].mxu0
    %464 = vmatprep.mubr.bf16.mxu0 0
    %465 = vmatmul.mubr.bf16.gmra.mrb[0].mxu0 %v318
    %v466 = vpop.f32.mrb[0].mxu0
    %v467 = vadd.f32 %v342, %v466
    %v468 = vpop.f32.mrb[0].mxu0
    %v469 = vpop.f32.mrb[0].mxu0
    %v470 = vadd.f32 %v342, %v469
    %v471 = vpop.f32.mrb[0].mxu0
    %472 = vmatprep.mubr.bf16.mxu0 0
    %473 = vmatmul.mubr.bf16.gmra.mrb[0].mxu0 %v319
    %v474 = vpop.f32.mrb[0].mxu0
    %v475 = vadd.f32 %v342, %v474
    %v476 = vpop.f32.mrb[0].mxu0
    %v477 = vpop.f32.mrb[0].mxu0
    %v478 = vadd.f32 %v342, %v477
    %v479 = vpop.f32.mrb[0].mxu0
    %480 = vmatprep.mubr.bf16.mxu0 0
    %481 = vmatmul.mubr.bf16.gmra.mrb[0].mxu0 %v320
    %v482 = vpop.f32.mrb[0].mxu0
    %v483 = vadd.f32 %v342, %v482
    %v484 = vpop.f32.mrb[0].mxu0
    %v485 = vpop.f32.mrb[0].mxu0
    %v486 = vadd.f32 %v342, %v485
    %v487 = vpop.f32.mrb[0].mxu0
    %488 = vdwg.mxu0
    %v489 = vmax.f32 %v427, 0.0
    %v490 = vmax.f32 %v430, 0.0
    %v491 = vmax.f32 %v435, 0.0
    %v492 = vmax.f32 %v438, 0.0
    %v493 = vmax.f32 %v443, 0.0
    %v494 = vmax.f32 %v446, 0.0
    %v495 = vmax.f32 %v451, 0.0
    %v496 = vmax.f32 %v454, 0.0
    %v497 = vmax.f32 %v459, 0.0
    %v498 = vmax.f32 %v462, 0.0
    %v499 = vmax.f32 %v467, 0.0
    %v500 = vmax.f32 %v470, 0.0
    %v501 = vmax.f32 %v475, 0.0
    %v502 = vmax.f32 %v478, 0.0
    %v503 = vmax.f32 %v483, 0.0
    %v504 = vmax.f32 %v486, 0.0
    %s505 = smul.u32 0, 16
    %v506 = vlaneseq
    %v507 = vshrl.u32 %v506, 7
    %v508 = vadd.s32 %v507, 8
    %v509 = vstv %s505
    %v510 = vadd.s32 %v509, %v507
    %v511 = vadd.s32 %v509, %v508
    %vm512 = vcmp.lt.s32.totalorder %v510, 8
    %vm513 = vcmp.lt.s32.totalorder %v511, 8
    %v514 = vsel %vm512, 1, 0
    %v515 = vsel %vm513, 1, 0
    %vm516 = vcmp.eq.s32.totalorder %v514, 1
    %vm517 = vcmp.eq.s32.totalorder %v515, 1
    %v518 = vsel %vm516, %v489, -inf
    %v519 = vsel %vm517, %v490, -inf
    %v520 = vsel %vm516, %v491, -inf
    %v521 = vsel %vm517, %v492, -inf
    %v522 = vsel %vm516, %v493, -inf
    %v523 = vsel %vm517, %v494, -inf
    %v524 = vsel %vm516, %v495, -inf
    %v525 = vsel %vm517, %v496, -inf
    %v526 = vsel %vm516, %v497, -inf
    %v527 = vsel %vm517, %v498, -inf
    %v528 = vsel %vm516, %v499, -inf
    %v529 = vsel %vm517, %v500, -inf
    %v530 = vsel %vm516, %v501, -inf
    %v531 = vsel %vm517, %v502, -inf
    %v532 = vsel %vm516, %v503, -inf
    %v533 = vsel %vm517, %v504, -inf
    %v534 = vld [vmem:[#allocation2] sm:$0xff]
    %v535 = vmax.f32 %v518, %v519
    %v536 = vrot.slane %v535, 4
    %v537 = vmax.f32 %v535, %v536
    %v538 = vrot.slane %v537, 2
    %v539 = vmax.f32 %v537, %v538
    %v540 = vrot.slane %v539, 1
    %v541 = vmax.f32 %v539, %v540
    %v542 = vmax.f32 %v520, %v521
    %v543 = vrot.slane %v542, 4
    %v544 = vmax.f32 %v542, %v543
    %v545 = vrot.slane %v544, 2
    %v546 = vmax.f32 %v544, %v545
    %v547 = vrot.slane %v546, 1
    %v548 = vmax.f32 %v546, %v547
    %v549 = vmax.f32 %v522, %v523
    %v550 = vrot.slane %v549, 4
    %v551 = vmax.f32 %v549, %v550
    %v552 = vrot.slane %v551, 2
    %v553 = vmax.f32 %v551, %v552
    %v554 = vrot.slane %v553, 1
    %v555 = vmax.f32 %v553, %v554
    %v556 = vmax.f32 %v524, %v525
    %v557 = vrot.slane %v556, 4
    %v558 = vmax.f32 %v556, %v557
    %v559 = vrot.slane %v558, 2
    %v560 = vmax.f32 %v558, %v559
    %v561 = vrot.slane %v560, 1
    %v562 = vmax.f32 %v560, %v561
    %v563 = vmax.f32 %v526, %v527
    %v564 = vrot.slane %v563, 4
    %v565 = vmax.f32 %v563, %v564
    %v566 = vrot.slane %v565, 2
    %v567 = vmax.f32 %v565, %v566
    %v568 = vrot.slane %v567, 1
    %v569 = vmax.f32 %v567, %v568
    %v570 = vmax.f32 %v528, %v529
    %v571 = vrot.slane %v570, 4
    %v572 = vmax.f32 %v570, %v571
    %v573 = vrot.slane %v572, 2
    %v574 = vmax.f32 %v572, %v573
    %v575 = vrot.slane %v574, 1
    %v576 = vmax.f32 %v574, %v575
    %v577 = vmax.f32 %v530, %v531
    %v578 = vrot.slane %v577, 4
    %v579 = vmax.f32 %v577, %v578
    %v580 = vrot.slane %v579, 2
    %v581 = vmax.f32 %v579, %v580
    %v582 = vrot.slane %v581, 1
    %v583 = vmax.f32 %v581, %v582
    %v584 = vmax.f32 %v532, %v533
    %v585 = vrot.slane %v584, 4
    %v586 = vmax.f32 %v584, %v585
    %v587 = vrot.slane %v586, 2
    %v588 = vmax.f32 %v586, %v587
    %v589 = vrot.slane %v588, 1
    %v590 = vmax.f32 %v588, %v589
    %vm599 = vcmask 1041409
    %v600 = vsel %vm599, %v548, %v541
    %vm601 = vcmask 1042434
    %v602 = vsel %vm601, %v555, %v600
    %vm603 = vcmask 1043459
    %v604 = vsel %vm603, %v562, %v602
    %vm605 = vcmask 1044484
    %v606 = vsel %vm605, %v569, %v604
    %vm607 = vcmask 1045509
    %v608 = vsel %vm607, %v576, %v606
    %vm609 = vcmask 1046534
    %v610 = vsel %vm609, %v583, %v608
    %vm611 = vcmask 1047559
    %v612 = vsel %vm611, %v590, %v610
    %v614 = vmax.f32 %v534, %v612
    %615 = vst [vmem:[#allocation2] sm:$0xff] %v614
    // Predicated region
    $region58: #{tpu_custom_call.1} parent=1 // pred_check
      %p616 = pneg %p91
    $region59: #{tpu_custom_call.1} parent=1 // pred_check_branch
      %618 = sbr.rel (%p616) target = $region61
    $region60: #{tpu_custom_call.1} parent=1 // pred_region
      %v619 = vld [vmem:[#allocation2] sm:$0xff]
      %v620 = vpack.c.bf16 %v619, %v619
      %v621 = vld [vmem:[#allocation10] sm:$0xf]
      %v622 = vld [vmem:[#allocation10 + $0x4] sm:$0xf]
      %v623 = vld [vmem:[#allocation10 + $0x8] sm:$0xf]
      %v624 = vld [vmem:[#allocation10 + $0xc] sm:$0xf]
      %v625 = vld [vmem:[#allocation10 + $0x10] sm:$0xf]
      %v626 = vld [vmem:[#allocation10 + $0x14] sm:$0xf]
      %v627 = vld [vmem:[#allocation10 + $0x18] sm:$0xf]
      %v628 = vld [vmem:[#allocation10 + $0x1c] sm:$0xf]
      %v629 = vld [vmem:[#allocation10 + $0x20] sm:$0xf]
      %v630 = vld [vmem:[#allocation10 + $0x24] sm:$0xf]
      %v631 = vld [vmem:[#allocation10 + $0x28] sm:$0xf]
      %v632 = vld [vmem:[#allocation10 + $0x2c] sm:$0xf]
      %v633 = vld [vmem:[#allocation10 + $0x30] sm:$0xf]
      %v634 = vld [vmem:[#allocation10 + $0x34] sm:$0xf]
      %v635 = vld [vmem:[#allocation10 + $0x38] sm:$0xf]
      %v636 = vld [vmem:[#allocation10 + $0x3c] sm:$0xf]
      %v637 = vld [vmem:[%s6] sm:$0x1]
      %v639 = vlaneseq
      %v640 = vshrl.u32 %v639, 7
      %v641 = vsub.s32 0, %v640
      %v642 = vrot.slane %v637, %v641
      %v660 = vunpack.c.l.b16 %v621
      %v661 = vunpack.c.l.b16 %v622
      %v662 = vunpack.c.l.b16 %v623
      %v663 = vunpack.c.l.b16 %v624
      %v664 = vunpack.c.l.b16 %v625
      %v665 = vunpack.c.l.b16 %v626
      %v666 = vunpack.c.l.b16 %v627
      %v667 = vunpack.c.l.b16 %v628
      %v668 = vunpack.c.l.b16 %v629
      %v669 = vunpack.c.l.b16 %v630
      %v670 = vunpack.c.l.b16 %v631
      %v671 = vunpack.c.l.b16 %v632
      %v672 = vunpack.c.l.b16 %v633
      %v673 = vunpack.c.l.b16 %v634
      %v674 = vunpack.c.l.b16 %v635
      %v675 = vunpack.c.l.b16 %v636
      %v676 = vpack.c.b16 %v661, %v660
      %v677 = vpack.c.b16 %v663, %v662
      %v678 = vpack.c.b16 %v665, %v664
      %v679 = vpack.c.b16 %v667, %v666
      %v680 = vpack.c.b16 %v669, %v668
      %v681 = vpack.c.b16 %v671, %v670
      %v682 = vpack.c.b16 %v673, %v672
      %v683 = vpack.c.b16 %v675, %v674
      %692 = vmatprep.subr.bf16.mxu0 0
      %693 = vmatpush1.bf16.msra.mxu0 %v676
      %694 = vmatprep.subr.bf16.mxu0 0
      %695 = vmatpush1.bf16.msra.mxu0 %v677
      %696 = vmatprep.subr.bf16.mxu0 0
      %697 = vmatpush1.bf16.msra.mxu0 %v678
      %698 = vmatprep.subr.bf16.mxu0 0
      %699 = vmatpush1.bf16.msra.mxu0 %v679
      %700 = vmatprep.subr.bf16.mxu0 0
      %701 = vmatpush1.bf16.msra.mxu0 %v680
      %702 = vmatprep.subr.bf16.mxu0 0
      %703 = vmatpush1.bf16.msra.mxu0 %v681
      %704 = vmatprep.subr.bf16.mxu0 0
      %705 = vmatpush1.bf16.msra.mxu0 %v682
      %706 = vmatprep.subr.bf16.mxu0 0
      %707 = vmatpush1.bf16.msra.mxu0 %v683
      %708 = vmatprep.subr.bf16.mxu0 0
      %709 = vmatpush1.bf16.msra.mxu0 0
      %710 = vmatprep.subr.bf16.mxu0 0
      %711 = vmatpush1.bf16.msra.mxu0 0
      %712 = vmatprep.subr.bf16.mxu0 0
      %713 = vmatpush1.bf16.msra.mxu0 0
      %714 = vmatprep.subr.bf16.mxu0 0
      %715 = vmatpush1.bf16.msra.mxu0 0
      %716 = vmatprep.subr.bf16.mxu0 0
      %717 = vmatpush1.bf16.msra.mxu0 0
      %718 = vmatprep.subr.bf16.mxu0 0
      %719 = vmatpush1.bf16.msra.mxu0 0
      %720 = vmatprep.subr.bf16.mxu0 0
      %721 = vmatpush1.bf16.msra.mxu0 0
      %722 = vmatprep.subr.bf16.mxu0 0
      %723 = vmatpush1.bf16.msra.mxu0 0
      %724 = vmatprep.mubr.bf16.mxu0 0
      %725 = vmatmul.mubr.bf16.gmra.mrb[0].mxu0 %v620
      %v726 = vpop.f32.mrb[0].mxu0
      %v727 = vadd.f32 %v642, %v726
      %v728 = vpop.f32.mrb[0].mxu0
      %v729 = vpop.f32.mrb[0].mxu0
      %v730 = vpop.f32.mrb[0].mxu0
      %731 = vdwg.mxu0
      %v732 = vmax.f32 %v727, 0.0
      %v733 = vld [vmem:[%s7] sm:$0x1]
      %v735 = vlaneseq
      %v736 = vshrl.u32 %v735, 7
      %v737 = vsub.s32 0, %v736
      %v738 = vrot.slane %v733, %v737
      %v740 = vmul.f32 %v732, %v738
      %741 = vadd.xlane.f32.xlu0 %v740
      %v742 = vpop.xlane.xlu0 %741
      %v743 = vld [vmem:[#allocation3] sm:$0x1]
      %v745 = vlaneseq
      %v746 = vshrl.u32 %v745, 7
      %v747 = vsub.s32 0, %v746
      %v748 = vrot.slane %v743, %v747
      %v750 = vadd.f32 %v742, %v748
      %v751 = vmin.f32 %v750, 0.0
      %v752 = vand.u32 2147483647, %v750
      %v753 = vsub.f32 0.0, %v752
      %v754 = vmul.f32 %v753, 1.442695
      %v755 = vpow.pop %v754
      %v756 = vadd.f32 %v755, 1.0
      %v757 = vlog2.pop %v756
      %v758 = vmul.f32 %v757, 0.6931472
      %v759 = vsub.f32 %v751, %v758
      %761 = vset.pattern.permute.xlu0 0
      %762 = vperm.xlu0 %761, %v759
      %v763 = vpop.permute.xlu0 %762
      %765 = vst [vmem:[#allocation12] sm:$0xff] %v763
    $region61: #{tpu_custom_call.1} parent=1 // pred_fallthru
      _
    // Predicated region
    $region62: #{tpu_custom_call.1} parent=1 // pred_check
      _
    $region63: #{tpu_custom_call.1} parent=1 // pred_check_branch
      %767 = sbr.rel (0) target = $region65
    $region64: #{tpu_custom_call.1} parent=1 // pred_region
      %s769 = ssub.s32 128, 128
      %770 = vsyncadd [#allocation6], %s769
      %s772 = sshll.u32 [#allocation12], 4
      %s773 = int_to_ptr.vmem [resolvable:$true] %s772
      %775 = dma.vmem_to_hbm [thread:$0]  %s773, 128, %s9, [#allocation6]
    $region65: #{tpu_custom_call.1} parent=1 // pred_fallthru
      _
    // Predicated region
    $region66: #{tpu_custom_call.1} parent=1 // pred_check
      _
    $region67: #{tpu_custom_call.1} parent=1 // pred_check_branch
      %777 = sbr.rel (0) target = $region69
    $region68: #{tpu_custom_call.1} parent=1 // pred_region
      %778 = dma.done [#allocation6], 128
    $region69: #{tpu_custom_call.1} parent=1 // pred_fallthru
      _
    %779 = vsyncpa [#allocation5], 1
    %780 = vsyncpa [#allocation8], 1
    %781 = vsyncpa [#allocation11], 1
    %782 = vsyncpa [#allocation6], 1

</llo_original>
